<compile_context>
chip_gen: v6e
topology: v6e:2x2x1
jax: 0.10.0
libtpu: 0.0.40
codegen_flags: <defaults>
</compile_context>

<pallas_src>
import math

import jax
import jax.numpy as jnp
from jax import lax
from jax.experimental import pallas as pl
from jax.experimental.pallas import tpu as pltpu


def make_encoding(dim, max_length):
    """Deterministic buffer construction, identical math to the torch __init__."""
    position = jnp.arange(0, max_length, dtype=jnp.float32)[:, None]        # (L, 1)
    div_term = jnp.exp(
        jnp.arange(0, dim, 2, dtype=jnp.float32)
        * (-math.log(max_length / 2 / math.pi) / dim)
    )                                                                        # (dim/2,)
    angles = position * div_term                                             # (L, dim/2)
    enc = jnp.zeros((max_length, dim), jnp.float32)
    enc = enc.at[:, 0::2].set(jnp.sin(angles))
    enc = enc.at[:, 1::2].set(jnp.cos(angles))
    return enc


def _round_up(v, m):
    return (v + m - 1) // m * m


def _make_gather_kernel(tile_rows, dim, pack):
    """Kernel gathering `tile_rows * pack` table rows per grid step,
    packing `pack` rows into each 128-lane-aligned output row."""
    packed = dim * pack

    def kernel(idx_ref, enc_ref, out_ref):
        # idx_ref: (padded_n,) int32 in SMEM (scalar-prefetched)
        # enc_ref: (max_length, packed) f32, VMEM-resident across all steps
        # out_ref: (tile_rows, packed) f32
        base = pl.program_id(0) * (tile_rows * pack)

        if pack > 1:
            # Lane-group masks, hoisted out of the loop (bcast is not CSE'd).
            lane = lax.broadcasted_iota(jnp.int32, (1, packed), 1)
            masks = [lane < (k * dim) for k in range(1, pack)]
        else:
            masks = []

        def body(r, carry):
            i0 = base + r * pack
            # Row 0 of this group; the tiled table repeats the row every `dim`
            # lanes, so each lane group already holds a full copy.
            acc = enc_ref[pl.ds(idx_ref[i0], 1), :]                   # (1, packed)
            for k in range(1, pack):
                row_k = enc_ref[pl.ds(idx_ref[i0 + k], 1), :]
                # lanes [k*dim, end) take row_k; earlier lanes keep acc.
                acc = jnp.where(masks[k - 1], acc, row_k)
            out_ref[pl.ds(r, 1), :] = acc                             # full-lane store
            return carry

        lax.fori_loop(0, tile_rows, body, 0, unroll=min(8, tile_rows))

    return kernel


def positional_encoding_lookup(encoding, x, *, max_tile_rows=512):
    """encoding: (max_length, dim) f32 table; x: integer index array (any shape).
    Returns encoding[x], shape x.shape + (dim,)."""
    max_length, dim = encoding.shape

    # Flatten, wrap negative indices (PyTorch semantics), clamp for DMA safety.
    idx = x.reshape(-1).astype(jnp.int32)
    idx = jnp.where(idx < 0, idx + max_length, idx)
    idx = jnp.clip(idx, 0, max_length - 1)
    n = idx.shape[0]

    # Lane packing factor: P gathered rows per 128-lane output row.
    pack = 128 // dim if (dim < 128 and 128 % dim == 0) else 1
    packed = pack * dim

    # Tile the table along lanes so every packed lane group holds a full row
    # copy (one-time XLA op outside the kernel).
    enc_packed = jnp.tile(encoding, (1, pack)) if pack > 1 else encoding

    rows_needed = max(-(-n // pack), 1)
    tile_rows = min(max_tile_rows, _round_up(rows_needed, 8))
    tile_rows = _round_up(tile_rows, 8)            # keep unroll=8 exact
    padded_rows = _round_up(rows_needed, tile_rows)
    padded_n = padded_rows * pack
    grid = (padded_rows // tile_rows,)

    idx_padded = jnp.zeros((padded_n,), jnp.int32).at[:n].set(idx)

    kernel = _make_gather_kernel(tile_rows, dim, pack)

    out = pl.pallas_call(
        kernel,
        out_shape=jax.ShapeDtypeStruct((padded_rows, packed), encoding.dtype),
        grid_spec=pltpu.PrefetchScalarGridSpec(
            num_scalar_prefetch=1,
            grid=grid,
            in_specs=[
                # Whole table resident in VMEM: same block for every step.
                pl.BlockSpec((max_length, packed), lambda i, idx_ref: (0, 0)),
            ],
            out_specs=pl.BlockSpec((tile_rows, packed), lambda i, idx_ref: (i, 0)),
        ),
        compiler_params=pltpu.CompilerParams(
            dimension_semantics=("parallel",),
        ),
    )(idx_padded, enc_packed)

    # (padded_rows, pack*dim) row-major == (padded_rows*pack, dim) row-major.
    flat = out.reshape(padded_rows * pack, dim)[:n]
    return flat.reshape(x.shape + (dim,))


if __name__ == "__main__":
    dim = 32
    max_length = 128          # small demo table; formula uses it exactly
    batch, seq = 2, 8

    encoding = make_encoding(dim, max_length)

    key = jax.random.PRNGKey(0)
    x = jax.random.randint(key, (batch, seq), 0, max_length, dtype=jnp.int32)

    y = positional_encoding_lookup(encoding, x)
    y = jax.block_until_ready(y)

    ref = jnp.take(encoding, x.reshape(-1), axis=0).reshape(x.shape + (dim,))
    assert y.shape == (batch, seq, dim), y.shape
    assert y.dtype == jnp.float32
    assert jnp.allclose(y, ref), "mismatch vs reference gather"

    # Second check: force multiple grid steps + padding path.
    x2 = jax.random.randint(jax.random.PRNGKey(1), (4, 33), 0, max_length,
                            dtype=jnp.int32)
    y2 = jax.block_until_ready(
        positional_encoding_lookup(encoding, x2, max_tile_rows=8))
    ref2 = jnp.take(encoding, x2.reshape(-1), axis=0).reshape(x2.shape + (dim,))
    assert jnp.allclose(y2, ref2), "mismatch vs reference gather (multi-tile)"

    print("KERNEL_OK")
</pallas_src>

<mosaic_0001>
module attributes {stable_mosaic.version = 11 : i64} {
  func.func @kernel(%arg0: i32, %arg1: memref<32xi32, #tpu.memory_space<smem>>, %arg2: memref<128x128xf32, #tpu.memory_space<vmem>>, %arg3: memref<8x128xf32, #tpu.memory_space<vmem>>) attributes {dimension_semantics = [#tpu.dimension_semantics<parallel>], iteration_bounds = array<i64: 1>, scalar_prefetch = 1 : i64, scratch_operands = 0 : i64, tpu.core_type = #tpu.core_type<tc>, window_params = [{pipeline_mode = #tpu.pipeline_mode<synchronous>, transform_indices = @transform_0, window_bounds = array<i64: 128, 128>}, {transform_indices = @transform_1, window_bounds = array<i64: 8, 128>}]} {
    %c32_i32 = arith.constant 32 : i32
    %0 = arith.muli %arg0, %c32_i32 : i32
    %1 = tpu.iota {dimensions = array<i32: 1>} : vector<1x128xi32>
    %c32_i32_0 = arith.constant 32 : i32
    %2 = vector.broadcast %c32_i32_0 : i32 to vector<1x128xi32>
    %3 = arith.cmpi slt, %1, %2 : vector<1x128xi32>
    %c64_i32 = arith.constant 64 : i32
    %4 = vector.broadcast %c64_i32 : i32 to vector<1x128xi32>
    %5 = arith.cmpi slt, %1, %4 : vector<1x128xi32>
    %c96_i32 = arith.constant 96 : i32
    %6 = vector.broadcast %c96_i32 : i32 to vector<1x128xi32>
    %7 = arith.cmpi slt, %1, %6 : vector<1x128xi32>
    %c0_i32 = arith.constant 0 : i32
    %c4_i32 = arith.constant 4 : i32
    %8 = arith.muli %c0_i32, %c4_i32 : i32
    %9 = arith.addi %0, %8 : i32
    %10 = arith.index_cast %9 : i32 to index
    %11 = memref.load %arg1[%10] : memref<32xi32, #tpu.memory_space<smem>>
    %12 = arith.index_cast %11 : i32 to index
    %c0 = arith.constant 0 : index
    %13 = vector.load %arg2[%12, %c0] : memref<128x128xf32, #tpu.memory_space<vmem>>, vector<1x128xf32>
    %c1_i32 = arith.constant 1 : i32
    %14 = arith.addi %9, %c1_i32 : i32
    %15 = arith.index_cast %14 : i32 to index
    %16 = memref.load %arg1[%15] : memref<32xi32, #tpu.memory_space<smem>>
    %17 = arith.index_cast %16 : i32 to index
    %c0_1 = arith.constant 0 : index
    %18 = vector.load %arg2[%17, %c0_1] : memref<128x128xf32, #tpu.memory_space<vmem>>, vector<1x128xf32>
    %19 = arith.select %3, %13, %18 : vector<1x128xi1>, vector<1x128xf32>
    %c2_i32 = arith.constant 2 : i32
    %20 = arith.addi %9, %c2_i32 : i32
    %21 = arith.index_cast %20 : i32 to index
    %22 = memref.load %arg1[%21] : memref<32xi32, #tpu.memory_space<smem>>
    %23 = arith.index_cast %22 : i32 to index
    %c0_2 = arith.constant 0 : index
    %24 = vector.load %arg2[%23, %c0_2] : memref<128x128xf32, #tpu.memory_space<vmem>>, vector<1x128xf32>
    %25 = arith.select %5, %19, %24 : vector<1x128xi1>, vector<1x128xf32>
    %c3_i32 = arith.constant 3 : i32
    %26 = arith.addi %9, %c3_i32 : i32
    %27 = arith.index_cast %26 : i32 to index
    %28 = memref.load %arg1[%27] : memref<32xi32, #tpu.memory_space<smem>>
    %29 = arith.index_cast %28 : i32 to index
    %c0_3 = arith.constant 0 : index
    %30 = vector.load %arg2[%29, %c0_3] : memref<128x128xf32, #tpu.memory_space<vmem>>, vector<1x128xf32>
    %31 = arith.select %7, %25, %30 : vector<1x128xi1>, vector<1x128xf32>
    %32 = arith.index_cast %c0_i32 : i32 to index
    %c0_4 = arith.constant 0 : index
    %33 = vector.load %arg3[%32, %c0_4] : memref<8x128xf32, #tpu.memory_space<vmem>>, vector<1x128xf32>
    tpu.vector_store %arg3[%32, %c0_4], %31 {strides = array<i32>} : memref<8x128xf32, #tpu.memory_space<vmem>>, vector<1x128xf32>,
    %c1_i32_5 = arith.constant 1 : i32
    %c4_i32_6 = arith.constant 4 : i32
    %34 = arith.muli %c1_i32_5, %c4_i32_6 : i32
    %35 = arith.addi %0, %34 : i32
    %36 = arith.index_cast %35 : i32 to index
    %37 = memref.load %arg1[%36] : memref<32xi32, #tpu.memory_space<smem>>
    %38 = arith.index_cast %37 : i32 to index
    %c0_7 = arith.constant 0 : index
    %39 = vector.load %arg2[%38, %c0_7] : memref<128x128xf32, #tpu.memory_space<vmem>>, vector<1x128xf32>
    %c1_i32_8 = arith.constant 1 : i32
    %40 = arith.addi %35, %c1_i32_8 : i32
    %41 = arith.index_cast %40 : i32 to index
    %42 = memref.load %arg1[%41] : memref<32xi32, #tpu.memory_space<smem>>
    %43 = arith.index_cast %42 : i32 to index
    %c0_9 = arith.constant 0 : index
    %44 = vector.load %arg2[%43, %c0_9] : memref<128x128xf32, #tpu.memory_space<vmem>>, vector<1x128xf32>
    %45 = arith.select %3, %39, %44 : vector<1x128xi1>, vector<1x128xf32>
    %c2_i32_10 = arith.constant 2 : i32
    %46 = arith.addi %35, %c2_i32_10 : i32
    %47 = arith.index_cast %46 : i32 to index
    %48 = memref.load %arg1[%47] : memref<32xi32, #tpu.memory_space<smem>>
    %49 = arith.index_cast %48 : i32 to index
    %c0_11 = arith.constant 0 : index
    %50 = vector.load %arg2[%49, %c0_11] : memref<128x128xf32, #tpu.memory_space<vmem>>, vector<1x128xf32>
    %51 = arith.select %5, %45, %50 : vector<1x128xi1>, vector<1x128xf32>
    %c3_i32_12 = arith.constant 3 : i32
    %52 = arith.addi %35, %c3_i32_12 : i32
    %53 = arith.index_cast %52 : i32 to index
    %54 = memref.load %arg1[%53] : memref<32xi32, #tpu.memory_space<smem>>
    %55 = arith.index_cast %54 : i32 to index
    %c0_13 = arith.constant 0 : index
    %56 = vector.load %arg2[%55, %c0_13] : memref<128x128xf32, #tpu.memory_space<vmem>>, vector<1x128xf32>
    %57 = arith.select %7, %51, %56 : vector<1x128xi1>, vector<1x128xf32>
    %58 = arith.index_cast %c1_i32_5 : i32 to index
    %c0_14 = arith.constant 0 : index
    %59 = vector.load %arg3[%58, %c0_14] : memref<8x128xf32, #tpu.memory_space<vmem>>, vector<1x128xf32>
    tpu.vector_store %arg3[%58, %c0_14], %57 {strides = array<i32>} : memref<8x128xf32, #tpu.memory_space<vmem>>, vector<1x128xf32>,
    %c2_i32_15 = arith.constant 2 : i32
    %c4_i32_16 = arith.constant 4 : i32
    %60 = arith.muli %c2_i32_15, %c4_i32_16 : i32
    %61 = arith.addi %0, %60 : i32
    %62 = arith.index_cast %61 : i32 to index
    %63 = memref.load %arg1[%62] : memref<32xi32, #tpu.memory_space<smem>>
    %64 = arith.index_cast %63 : i32 to index
    %c0_17 = arith.constant 0 : index
    %65 = vector.load %arg2[%64, %c0_17] : memref<128x128xf32, #tpu.memory_space<vmem>>, vector<1x128xf32>
    %c1_i32_18 = arith.constant 1 : i32
    %66 = arith.addi %61, %c1_i32_18 : i32
    %67 = arith.index_cast %66 : i32 to index
    %68 = memref.load %arg1[%67] : memref<32xi32, #tpu.memory_space<smem>>
    %69 = arith.index_cast %68 : i32 to index
    %c0_19 = arith.constant 0 : index
    %70 = vector.load %arg2[%69, %c0_19] : memref<128x128xf32, #tpu.memory_space<vmem>>, vector<1x128xf32>
    %71 = arith.select %3, %65, %70 : vector<1x128xi1>, vector<1x128xf32>
    %c2_i32_20 = arith.constant 2 : i32
    %72 = arith.addi %61, %c2_i32_20 : i32
    %73 = arith.index_cast %72 : i32 to index
    %74 = memref.load %arg1[%73] : memref<32xi32, #tpu.memory_space<smem>>
    %75 = arith.index_cast %74 : i32 to index
    %c0_21 = arith.constant 0 : index
    %76 = vector.load %arg2[%75, %c0_21] : memref<128x128xf32, #tpu.memory_space<vmem>>, vector<1x128xf32>
    %77 = arith.select %5, %71, %76 : vector<1x128xi1>, vector<1x128xf32>
    %c3_i32_22 = arith.constant 3 : i32
    %78 = arith.addi %61, %c3_i32_22 : i32
    %79 = arith.index_cast %78 : i32 to index
    %80 = memref.load %arg1[%79] : memref<32xi32, #tpu.memory_space<smem>>
    %81 = arith.index_cast %80 : i32 to index
    %c0_23 = arith.constant 0 : index
    %82 = vector.load %arg2[%81, %c0_23] : memref<128x128xf32, #tpu.memory_space<vmem>>, vector<1x128xf32>
    %83 = arith.select %7, %77, %82 : vector<1x128xi1>, vector<1x128xf32>
    %84 = arith.index_cast %c2_i32_15 : i32 to index
    %c0_24 = arith.constant 0 : index
    %85 = vector.load %arg3[%84, %c0_24] : memref<8x128xf32, #tpu.memory_space<vmem>>, vector<1x128xf32>
    tpu.vector_store %arg3[%84, %c0_24], %83 {strides = array<i32>} : memref<8x128xf32, #tpu.memory_space<vmem>>, vector<1x128xf32>,
    %c3_i32_25 = arith.constant 3 : i32
    %c4_i32_26 = arith.constant 4 : i32
    %86 = arith.muli %c3_i32_25, %c4_i32_26 : i32
    %87 = arith.addi %0, %86 : i32
    %88 = arith.index_cast %87 : i32 to index
    %89 = memref.load %arg1[%88] : memref<32xi32, #tpu.memory_space<smem>>
    %90 = arith.index_cast %89 : i32 to index
    %c0_27 = arith.constant 0 : index
    %91 = vector.load %arg2[%90, %c0_27] : memref<128x128xf32, #tpu.memory_space<vmem>>, vector<1x128xf32>
    %c1_i32_28 = arith.constant 1 : i32
    %92 = arith.addi %87, %c1_i32_28 : i32
    %93 = arith.index_cast %92 : i32 to index
    %94 = memref.load %arg1[%93] : memref<32xi32, #tpu.memory_space<smem>>
    %95 = arith.index_cast %94 : i32 to index
    %c0_29 = arith.constant 0 : index
    %96 = vector.load %arg2[%95, %c0_29] : memref<128x128xf32, #tpu.memory_space<vmem>>, vector<1x128xf32>
    %97 = arith.select %3, %91, %96 : vector<1x128xi1>, vector<1x128xf32>
    %c2_i32_30 = arith.constant 2 : i32
    %98 = arith.addi %87, %c2_i32_30 : i32
    %99 = arith.index_cast %98 : i32 to index
    %100 = memref.load %arg1[%99] : memref<32xi32, #tpu.memory_space<smem>>
    %101 = arith.index_cast %100 : i32 to index
    %c0_31 = arith.constant 0 : index
    %102 = vector.load %arg2[%101, %c0_31] : memref<128x128xf32, #tpu.memory_space<vmem>>, vector<1x128xf32>
    %103 = arith.select %5, %97, %102 : vector<1x128xi1>, vector<1x128xf32>
    %c3_i32_32 = arith.constant 3 : i32
    %104 = arith.addi %87, %c3_i32_32 : i32
    %105 = arith.index_cast %104 : i32 to index
    %106 = memref.load %arg1[%105] : memref<32xi32, #tpu.memory_space<smem>>
    %107 = arith.index_cast %106 : i32 to index
    %c0_33 = arith.constant 0 : index
    %108 = vector.load %arg2[%107, %c0_33] : memref<128x128xf32, #tpu.memory_space<vmem>>, vector<1x128xf32>
    %109 = arith.select %7, %103, %108 : vector<1x128xi1>, vector<1x128xf32>
    %110 = arith.index_cast %c3_i32_25 : i32 to index
    %c0_34 = arith.constant 0 : index
    %111 = vector.load %arg3[%110, %c0_34] : memref<8x128xf32, #tpu.memory_space<vmem>>, vector<1x128xf32>
    tpu.vector_store %arg3[%110, %c0_34], %109 {strides = array<i32>} : memref<8x128xf32, #tpu.memory_space<vmem>>, vector<1x128xf32>,
    %c4_i32_35 = arith.constant 4 : i32
    %c4_i32_36 = arith.constant 4 : i32
    %112 = arith.muli %c4_i32_35, %c4_i32_36 : i32
    %113 = arith.addi %0, %112 : i32
    %114 = arith.index_cast %113 : i32 to index
    %115 = memref.load %arg1[%114] : memref<32xi32, #tpu.memory_space<smem>>
    %116 = arith.index_cast %115 : i32 to index
    %c0_37 = arith.constant 0 : index
    %117 = vector.load %arg2[%116, %c0_37] : memref<128x128xf32, #tpu.memory_space<vmem>>, vector<1x128xf32>
    %c1_i32_38 = arith.constant 1 : i32
    %118 = arith.addi %113, %c1_i32_38 : i32
    %119 = arith.index_cast %118 : i32 to index
    %120 = memref.load %arg1[%119] : memref<32xi32, #tpu.memory_space<smem>>
    %121 = arith.index_cast %120 : i32 to index
    %c0_39 = arith.constant 0 : index
    %122 = vector.load %arg2[%121, %c0_39] : memref<128x128xf32, #tpu.memory_space<vmem>>, vector<1x128xf32>
    %123 = arith.select %3, %117, %122 : vector<1x128xi1>, vector<1x128xf32>
    %c2_i32_40 = arith.constant 2 : i32
    %124 = arith.addi %113, %c2_i32_40 : i32
    %125 = arith.index_cast %124 : i32 to index
    %126 = memref.load %arg1[%125] : memref<32xi32, #tpu.memory_space<smem>>
    %127 = arith.index_cast %126 : i32 to index
    %c0_41 = arith.constant 0 : index
    %128 = vector.load %arg2[%127, %c0_41] : memref<128x128xf32, #tpu.memory_space<vmem>>, vector<1x128xf32>
    %129 = arith.select %5, %123, %128 : vector<1x128xi1>, vector<1x128xf32>
    %c3_i32_42 = arith.constant 3 : i32
    %130 = arith.addi %113, %c3_i32_42 : i32
    %131 = arith.index_cast %130 : i32 to index
    %132 = memref.load %arg1[%131] : memref<32xi32, #tpu.memory_space<smem>>
    %133 = arith.index_cast %132 : i32 to index
    %c0_43 = arith.constant 0 : index
    %134 = vector.load %arg2[%133, %c0_43] : memref<128x128xf32, #tpu.memory_space<vmem>>, vector<1x128xf32>
    %135 = arith.select %7, %129, %134 : vector<1x128xi1>, vector<1x128xf32>
    %136 = arith.index_cast %c4_i32_35 : i32 to index
    %c0_44 = arith.constant 0 : index
    %137 = vector.load %arg3[%136, %c0_44] : memref<8x128xf32, #tpu.memory_space<vmem>>, vector<1x128xf32>
    tpu.vector_store %arg3[%136, %c0_44], %135 {strides = array<i32>} : memref<8x128xf32, #tpu.memory_space<vmem>>, vector<1x128xf32>,
    %c5_i32 = arith.constant 5 : i32
    %c4_i32_45 = arith.constant 4 : i32
    %138 = arith.muli %c5_i32, %c4_i32_45 : i32
    %139 = arith.addi %0, %138 : i32
    %140 = arith.index_cast %139 : i32 to index
    %141 = memref.load %arg1[%140] : memref<32xi32, #tpu.memory_space<smem>>
    %142 = arith.index_cast %141 : i32 to index
    %c0_46 = arith.constant 0 : index
    %143 = vector.load %arg2[%142, %c0_46] : memref<128x128xf32, #tpu.memory_space<vmem>>, vector<1x128xf32>
    %c1_i32_47 = arith.constant 1 : i32
    %144 = arith.addi %139, %c1_i32_47 : i32
    %145 = arith.index_cast %144 : i32 to index
    %146 = memref.load %arg1[%145] : memref<32xi32, #tpu.memory_space<smem>>
    %147 = arith.index_cast %146 : i32 to index
    %c0_48 = arith.constant 0 : index
    %148 = vector.load %arg2[%147, %c0_48] : memref<128x128xf32, #tpu.memory_space<vmem>>, vector<1x128xf32>
    %149 = arith.select %3, %143, %148 : vector<1x128xi1>, vector<1x128xf32>
    %c2_i32_49 = arith.constant 2 : i32
    %150 = arith.addi %139, %c2_i32_49 : i32
    %151 = arith.index_cast %150 : i32 to index
    %152 = memref.load %arg1[%151] : memref<32xi32, #tpu.memory_space<smem>>
    %153 = arith.index_cast %152 : i32 to index
    %c0_50 = arith.constant 0 : index
    %154 = vector.load %arg2[%153, %c0_50] : memref<128x128xf32, #tpu.memory_space<vmem>>, vector<1x128xf32>
    %155 = arith.select %5, %149, %154 : vector<1x128xi1>, vector<1x128xf32>
    %c3_i32_51 = arith.constant 3 : i32
    %156 = arith.addi %139, %c3_i32_51 : i32
    %157 = arith.index_cast %156 : i32 to index
    %158 = memref.load %arg1[%157] : memref<32xi32, #tpu.memory_space<smem>>
    %159 = arith.index_cast %158 : i32 to index
    %c0_52 = arith.constant 0 : index
    %160 = vector.load %arg2[%159, %c0_52] : memref<128x128xf32, #tpu.memory_space<vmem>>, vector<1x128xf32>
    %161 = arith.select %7, %155, %160 : vector<1x128xi1>, vector<1x128xf32>
    %162 = arith.index_cast %c5_i32 : i32 to index
    %c0_53 = arith.constant 0 : index
    %163 = vector.load %arg3[%162, %c0_53] : memref<8x128xf32, #tpu.memory_space<vmem>>, vector<1x128xf32>
    tpu.vector_store %arg3[%162, %c0_53], %161 {strides = array<i32>} : memref<8x128xf32, #tpu.memory_space<vmem>>, vector<1x128xf32>,
    %c6_i32 = arith.constant 6 : i32
    %c4_i32_54 = arith.constant 4 : i32
    %164 = arith.muli %c6_i32, %c4_i32_54 : i32
    %165 = arith.addi %0, %164 : i32
    %166 = arith.index_cast %165 : i32 to index
    %167 = memref.load %arg1[%166] : memref<32xi32, #tpu.memory_space<smem>>
    %168 = arith.index_cast %167 : i32 to index
    %c0_55 = arith.constant 0 : index
    %169 = vector.load %arg2[%168, %c0_55] : memref<128x128xf32, #tpu.memory_space<vmem>>, vector<1x128xf32>
    %c1_i32_56 = arith.constant 1 : i32
    %170 = arith.addi %165, %c1_i32_56 : i32
    %171 = arith.index_cast %170 : i32 to index
    %172 = memref.load %arg1[%171] : memref<32xi32, #tpu.memory_space<smem>>
    %173 = arith.index_cast %172 : i32 to index
    %c0_57 = arith.constant 0 : index
    %174 = vector.load %arg2[%173, %c0_57] : memref<128x128xf32, #tpu.memory_space<vmem>>, vector<1x128xf32>
    %175 = arith.select %3, %169, %174 : vector<1x128xi1>, vector<1x128xf32>
    %c2_i32_58 = arith.constant 2 : i32
    %176 = arith.addi %165, %c2_i32_58 : i32
    %177 = arith.index_cast %176 : i32 to index
    %178 = memref.load %arg1[%177] : memref<32xi32, #tpu.memory_space<smem>>
    %179 = arith.index_cast %178 : i32 to index
    %c0_59 = arith.constant 0 : index
    %180 = vector.load %arg2[%179, %c0_59] : memref<128x128xf32, #tpu.memory_space<vmem>>, vector<1x128xf32>
    %181 = arith.select %5, %175, %180 : vector<1x128xi1>, vector<1x128xf32>
    %c3_i32_60 = arith.constant 3 : i32
    %182 = arith.addi %165, %c3_i32_60 : i32
    %183 = arith.index_cast %182 : i32 to index
    %184 = memref.load %arg1[%183] : memref<32xi32, #tpu.memory_space<smem>>
    %185 = arith.index_cast %184 : i32 to index
    %c0_61 = arith.constant 0 : index
    %186 = vector.load %arg2[%185, %c0_61] : memref<128x128xf32, #tpu.memory_space<vmem>>, vector<1x128xf32>
    %187 = arith.select %7, %181, %186 : vector<1x128xi1>, vector<1x128xf32>
    %188 = arith.index_cast %c6_i32 : i32 to index
    %c0_62 = arith.constant 0 : index
    %189 = vector.load %arg3[%188, %c0_62] : memref<8x128xf32, #tpu.memory_space<vmem>>, vector<1x128xf32>
    tpu.vector_store %arg3[%188, %c0_62], %187 {strides = array<i32>} : memref<8x128xf32, #tpu.memory_space<vmem>>, vector<1x128xf32>,
    %c7_i32 = arith.constant 7 : i32
    %c4_i32_63 = arith.constant 4 : i32
    %190 = arith.muli %c7_i32, %c4_i32_63 : i32
    %191 = arith.addi %0, %190 : i32
    %192 = arith.index_cast %191 : i32 to index
    %193 = memref.load %arg1[%192] : memref<32xi32, #tpu.memory_space<smem>>
    %194 = arith.index_cast %193 : i32 to index
    %c0_64 = arith.constant 0 : index
    %195 = vector.load %arg2[%194, %c0_64] : memref<128x128xf32, #tpu.memory_space<vmem>>, vector<1x128xf32>
    %c1_i32_65 = arith.constant 1 : i32
    %196 = arith.addi %191, %c1_i32_65 : i32
    %197 = arith.index_cast %196 : i32 to index
    %198 = memref.load %arg1[%197] : memref<32xi32, #tpu.memory_space<smem>>
    %199 = arith.index_cast %198 : i32 to index
    %c0_66 = arith.constant 0 : index
    %200 = vector.load %arg2[%199, %c0_66] : memref<128x128xf32, #tpu.memory_space<vmem>>, vector<1x128xf32>
    %201 = arith.select %3, %195, %200 : vector<1x128xi1>, vector<1x128xf32>
    %c2_i32_67 = arith.constant 2 : i32
    %202 = arith.addi %191, %c2_i32_67 : i32
    %203 = arith.index_cast %202 : i32 to index
    %204 = memref.load %arg1[%203] : memref<32xi32, #tpu.memory_space<smem>>
    %205 = arith.index_cast %204 : i32 to index
    %c0_68 = arith.constant 0 : index
    %206 = vector.load %arg2[%205, %c0_68] : memref<128x128xf32, #tpu.memory_space<vmem>>, vector<1x128xf32>
    %207 = arith.select %5, %201, %206 : vector<1x128xi1>, vector<1x128xf32>
    %c3_i32_69 = arith.constant 3 : i32
    %208 = arith.addi %191, %c3_i32_69 : i32
    %209 = arith.index_cast %208 : i32 to index
    %210 = memref.load %arg1[%209] : memref<32xi32, #tpu.memory_space<smem>>
    %211 = arith.index_cast %210 : i32 to index
    %c0_70 = arith.constant 0 : index
    %212 = vector.load %arg2[%211, %c0_70] : memref<128x128xf32, #tpu.memory_space<vmem>>, vector<1x128xf32>
    %213 = arith.select %7, %207, %212 : vector<1x128xi1>, vector<1x128xf32>
    %214 = arith.index_cast %c7_i32 : i32 to index
    %c0_71 = arith.constant 0 : index
    %215 = vector.load %arg3[%214, %c0_71] : memref<8x128xf32, #tpu.memory_space<vmem>>, vector<1x128xf32>
    tpu.vector_store %arg3[%214, %c0_71], %213 {strides = array<i32>} : memref<8x128xf32, #tpu.memory_space<vmem>>, vector<1x128xf32>,
    %c8_i32 = arith.constant 8 : i32
    return
  }
  func.func @transform_0(%arg0: i32, %arg1: memref<32xi32, #tpu.memory_space<smem>>) -> (i32, i32) {
    %c0_i32 = arith.constant 0 : i32
    %c0_i32_0 = arith.constant 0 : i32
    %c0_i32_1 = arith.constant 0 : i32
    return %c0_i32, %c0_i32_0 : i32, i32
  }
  func.func @transform_1(%arg0: i32, %arg1: memref<32xi32, #tpu.memory_space<smem>>) -> (i32, i32) {
    %c0_i32 = arith.constant 0 : i32
    %c0_i32_0 = arith.constant 0 : i32
    return %arg0, %c0_i32 : i32, i32
  }
}

</mosaic_0001>

<llo_original>
// kernel: tpu_custom_call.1
$region0: #{tpu_custom_call.1}
  #allocation0 [shape = 'u32[]', space=smem, size = 0x4, offset = 0x4, fixed_abs, tag = 'smem constant byte address 0x4 - core index']
  #allocation1 [shape = 'u32[144,128]{1,0:T(1,128)}', space=vmem, size = 0x12000, scoped, tag = 'internal scratch']
  #allocation2 [shape = 's32[1]{0}', space=sflag, size = 0x4, scoped, tag = 'scoped memory for tpu_custom_call.1']
  #allocation3 [shape = 'u8[512]{0}', space=smem, size = 0x200, scoped, tag = 'prefetched SMEM operand 0']
  %s0 = inlined_call_operand.hbm [shape: s32[32], index: 0, kind: input, shape index: {}]
  %s1 = inlined_call_operand.hbm [shape: f32[128,128], index: 1, kind: input, shape index: {}]
  %s2 = inlined_call_operand.hbm [shape: f32[8,128], index: 2, kind: output, shape index: {}]
  %s3 = sld [smem:[#allocation0]]
  $region18: #{tpu_custom_call.1} parent=0
    _
  %s5 = ssub.s32 1, %s3
  %s6 = scalar_select 0, %s5, %s3
  %8 = dma.hbm_to_smem %s0, 16, [#allocation3], [#allocation2]
  %9 = dma.done [#allocation2], 16
  %10 = sfence
  $region1: #{tpu_custom_call.1} parent=0
    #allocation4 [shape = 'u8[65536]{0}', space=vmem, size = 0x10000, scoped, tag = 'input window, operand 1, single buffered']
    #allocation5 [shape = 's32[1]{0}', space=sflag, size = 0x4, scoped, tag = 'scoped memory for tpu_custom_call.1']
    #allocation6 [shape = 's32[1]{0}', space=sflag, size = 0x4, scoped, tag = 'scoped memory for tpu_custom_call.1']
    #allocation7 [shape = 'u8[4096]{0}', space=vmem, size = 0x1000, scoped, tag = 'output window, operand 0, single buffered']
    %11 = vsyncpa [#allocation5], 0
    %12 = vsyncpa [#allocation6], 0
    // Predicated region
    $region2: #{tpu_custom_call.1} parent=1 // pred_check
      _
    $region3: #{tpu_custom_call.1} parent=1 // pred_check_branch
      %14 = sbr.rel (0) target = $region5
    $region4: #{tpu_custom_call.1} parent=1 // pred_region
      %s16 = ssub.s32 2048, 2048
      %17 = vsyncadd [#allocation5], %s16
      %s18 = sshll.u32 [#allocation4], 4
      %s19 = int_to_ptr.vmem [resolvable:$true] %s18
      %24 = dma.hbm_to_vmem [thread:$0]  %s1, 2048, %s19, [#allocation5], 128, 128, 8
    $region5: #{tpu_custom_call.1} parent=1 // pred_fallthru
      _
    // Predicated region
    $region6: #{tpu_custom_call.1} parent=1 // pred_check
      _
    $region7: #{tpu_custom_call.1} parent=1 // pred_check_branch
      %26 = sbr.rel (0) target = $region9
    $region8: #{tpu_custom_call.1} parent=1 // pred_region
      %27 = dma.done [#allocation5], 2048
    $region9: #{tpu_custom_call.1} parent=1 // pred_fallthru
      _
    %s28 = smul.u32 0, 32
    %v29 = vlaneseq
    %v30 = vand.u32 %v29, 127
    %vm31 = vcmp.lt.s32.totalorder %v30, 32
    %vm32 = vcmp.lt.s32.totalorder %v30, 64
    %vm33 = vcmp.lt.s32.totalorder %v30, 96
    %s34 = sld [smem:[#allocation3 + %s28]]
    %s35 = scalar_lea.vmem [#allocation4], %s34
    %v36 = vld [vmem:[%s35] sm:$0x1]
    %s37 = sadd.s32 %s28, 1
    %s38 = sld [smem:[#allocation3 + %s37]]
    %s39 = scalar_lea.vmem [#allocation4], %s38
    %v40 = vld [vmem:[%s39] sm:$0x1]
    %v41 = vsel %vm31, %v36, %v40
    %s42 = sadd.s32 %s28, 2
    %s43 = sld [smem:[#allocation3 + %s42]]
    %s44 = scalar_lea.vmem [#allocation4], %s43
    %v45 = vld [vmem:[%s44] sm:$0x1]
    %v46 = vsel %vm32, %v41, %v45
    %s47 = sadd.s32 %s28, 3
    %s48 = sld [smem:[#allocation3 + %s47]]
    %s49 = scalar_lea.vmem [#allocation4], %s48
    %v50 = vld [vmem:[%s49] sm:$0x1]
    %v51 = vsel %vm33, %v46, %v50
    %52 = vst [vmem:[#allocation7] sm:$0x1] %v51
    %s53 = sadd.s32 %s28, 4
    %s54 = sld [smem:[#allocation3 + %s53]]
    %s55 = scalar_lea.vmem [#allocation4], %s54
    %v56 = vld [vmem:[%s55] sm:$0x1]
    %s57 = sadd.s32 %s28, 5
    %s58 = sld [smem:[#allocation3 + %s57]]
    %s59 = scalar_lea.vmem [#allocation4], %s58
    %v60 = vld [vmem:[%s59] sm:$0x1]
    %v61 = vsel %vm31, %v56, %v60
    %s62 = sadd.s32 %s28, 6
    %s63 = sld [smem:[#allocation3 + %s62]]
    %s64 = scalar_lea.vmem [#allocation4], %s63
    %v65 = vld [vmem:[%s64] sm:$0x1]
    %v66 = vsel %vm32, %v61, %v65
    %s67 = sadd.s32 %s28, 7
    %s68 = sld [smem:[#allocation3 + %s67]]
    %s69 = scalar_lea.vmem [#allocation4], %s68
    %v70 = vld [vmem:[%s69] sm:$0x1]
    %v71 = vsel %vm33, %v66, %v70
    %72 = vst [vmem:[#allocation7 + $0x1] sm:$0x1] %v71
    %s73 = sadd.s32 %s28, 8
    %s74 = sld [smem:[#allocation3 + %s73]]
    %s75 = scalar_lea.vmem [#allocation4], %s74
    %v76 = vld [vmem:[%s75] sm:$0x1]
    %s77 = sadd.s32 %s28, 9
    %s78 = sld [smem:[#allocation3 + %s77]]
    %s79 = scalar_lea.vmem [#allocation4], %s78
    %v80 = vld [vmem:[%s79] sm:$0x1]
    %v81 = vsel %vm31, %v76, %v80
    %s82 = sadd.s32 %s28, 10
    %s83 = sld [smem:[#allocation3 + %s82]]
    %s84 = scalar_lea.vmem [#allocation4], %s83
    %v85 = vld [vmem:[%s84] sm:$0x1]
    %v86 = vsel %vm32, %v81, %v85
    %s87 = sadd.s32 %s28, 11
    %s88 = sld [smem:[#allocation3 + %s87]]
    %s89 = scalar_lea.vmem [#allocation4], %s88
    %v90 = vld [vmem:[%s89] sm:$0x1]
    %v91 = vsel %vm33, %v86, %v90
    %92 = vst [vmem:[#allocation7 + $0x2] sm:$0x1] %v91
    %s93 = sadd.s32 %s28, 12
    %s94 = sld [smem:[#allocation3 + %s93]]
    %s95 = scalar_lea.vmem [#allocation4], %s94
    %v96 = vld [vmem:[%s95] sm:$0x1]
    %s97 = sadd.s32 %s28, 13
    %s98 = sld [smem:[#allocation3 + %s97]]
    %s99 = scalar_lea.vmem [#allocation4], %s98
    %v100 = vld [vmem:[%s99] sm:$0x1]
    %v101 = vsel %vm31, %v96, %v100
    %s102 = sadd.s32 %s28, 14
    %s103 = sld [smem:[#allocation3 + %s102]]
    %s104 = scalar_lea.vmem [#allocation4], %s103
    %v105 = vld [vmem:[%s104] sm:$0x1]
    %v106 = vsel %vm32, %v101, %v105
    %s107 = sadd.s32 %s28, 15
    %s108 = sld [smem:[#allocation3 + %s107]]
    %s109 = scalar_lea.vmem [#allocation4], %s108
    %v110 = vld [vmem:[%s109] sm:$0x1]
    %v111 = vsel %vm33, %v106, %v110
    %112 = vst [vmem:[#allocation7 + $0x3] sm:$0x1] %v111
    %s113 = sadd.s32 %s28, 16
    %s114 = sld [smem:[#allocation3 + %s113]]
    %s115 = scalar_lea.vmem [#allocation4], %s114
    %v116 = vld [vmem:[%s115] sm:$0x1]
    %s117 = sadd.s32 %s28, 17
    %s118 = sld [smem:[#allocation3 + %s117]]
    %s119 = scalar_lea.vmem [#allocation4], %s118
    %v120 = vld [vmem:[%s119] sm:$0x1]
    %v121 = vsel %vm31, %v116, %v120
    %s122 = sadd.s32 %s28, 18
    %s123 = sld [smem:[#allocation3 + %s122]]
    %s124 = scalar_lea.vmem [#allocation4], %s123
    %v125 = vld [vmem:[%s124] sm:$0x1]
    %v126 = vsel %vm32, %v121, %v125
    %s127 = sadd.s32 %s28, 19
    %s128 = sld [smem:[#allocation3 + %s127]]
    %s129 = scalar_lea.vmem [#allocation4], %s128
    %v130 = vld [vmem:[%s129] sm:$0x1]
    %v131 = vsel %vm33, %v126, %v130
    %132 = vst [vmem:[#allocation7 + $0x4] sm:$0x1] %v131
    %s133 = sadd.s32 %s28, 20
    %s134 = sld [smem:[#allocation3 + %s133]]
    %s135 = scalar_lea.vmem [#allocation4], %s134
    %v136 = vld [vmem:[%s135] sm:$0x1]
    %s137 = sadd.s32 %s28, 21
    %s138 = sld [smem:[#allocation3 + %s137]]
    %s139 = scalar_lea.vmem [#allocation4], %s138
    %v140 = vld [vmem:[%s139] sm:$0x1]
    %v141 = vsel %vm31, %v136, %v140
    %s142 = sadd.s32 %s28, 22
    %s143 = sld [smem:[#allocation3 + %s142]]
    %s144 = scalar_lea.vmem [#allocation4], %s143
    %v145 = vld [vmem:[%s144] sm:$0x1]
    %v146 = vsel %vm32, %v141, %v145
    %s147 = sadd.s32 %s28, 23
    %s148 = sld [smem:[#allocation3 + %s147]]
    %s149 = scalar_lea.vmem [#allocation4], %s148
    %v150 = vld [vmem:[%s149] sm:$0x1]
    %v151 = vsel %vm33, %v146, %v150
    %152 = vst [vmem:[#allocation7 + $0x5] sm:$0x1] %v151
    %s153 = sadd.s32 %s28, 24
    %s154 = sld [smem:[#allocation3 + %s153]]
    %s155 = scalar_lea.vmem [#allocation4], %s154
    %v156 = vld [vmem:[%s155] sm:$0x1]
    %s157 = sadd.s32 %s28, 25
    %s158 = sld [smem:[#allocation3 + %s157]]
    %s159 = scalar_lea.vmem [#allocation4], %s158
    %v160 = vld [vmem:[%s159] sm:$0x1]
    %v161 = vsel %vm31, %v156, %v160
    %s162 = sadd.s32 %s28, 26
    %s163 = sld [smem:[#allocation3 + %s162]]
    %s164 = scalar_lea.vmem [#allocation4], %s163
    %v165 = vld [vmem:[%s164] sm:$0x1]
    %v166 = vsel %vm32, %v161, %v165
    %s167 = sadd.s32 %s28, 27
    %s168 = sld [smem:[#allocation3 + %s167]]
    %s169 = scalar_lea.vmem [#allocation4], %s168
    %v170 = vld [vmem:[%s169] sm:$0x1]
    %v171 = vsel %vm33, %v166, %v170
    %172 = vst [vmem:[#allocation7 + $0x6] sm:$0x1] %v171
    %s173 = sadd.s32 %s28, 28
    %s174 = sld [smem:[#allocation3 + %s173]]
    %s175 = scalar_lea.vmem [#allocation4], %s174
    %v176 = vld [vmem:[%s175] sm:$0x1]
    %s177 = sadd.s32 %s28, 29
    %s178 = sld [smem:[#allocation3 + %s177]]
    %s179 = scalar_lea.vmem [#allocation4], %s178
    %v180 = vld [vmem:[%s179] sm:$0x1]
    %v181 = vsel %vm31, %v176, %v180
    %s182 = sadd.s32 %s28, 30
    %s183 = sld [smem:[#allocation3 + %s182]]
    %s184 = scalar_lea.vmem [#allocation4], %s183
    %v185 = vld [vmem:[%s184] sm:$0x1]
    %v186 = vsel %vm32, %v181, %v185
    %s187 = sadd.s32 %s28, 31
    %s188 = sld [smem:[#allocation3 + %s187]]
    %s189 = scalar_lea.vmem [#allocation4], %s188
    %v190 = vld [vmem:[%s189] sm:$0x1]
    %v191 = vsel %vm33, %v186, %v190
    %192 = vst [vmem:[#allocation7 + $0x7] sm:$0x1] %v191
    // Predicated region
    $region10: #{tpu_custom_call.1} parent=1 // pred_check
      _
    $region11: #{tpu_custom_call.1} parent=1 // pred_check_branch
      %194 = sbr.rel (0) target = $region13
    $region12: #{tpu_custom_call.1} parent=1 // pred_region
      %s196 = ssub.s32 128, 128
      %197 = vsyncadd [#allocation6], %s196
      %s199 = sshll.u32 [#allocation7], 4
      %s200 = int_to_ptr.vmem [resolvable:$true] %s199
      %202 = dma.vmem_to_hbm [thread:$0]  %s200, 128, %s2, [#allocation6]
    $region13: #{tpu_custom_call.1} parent=1 // pred_fallthru
      _
    // Predicated region
    $region14: #{tpu_custom_call.1} parent=1 // pred_check
      _
    $region15: #{tpu_custom_call.1} parent=1 // pred_check_branch
      %204 = sbr.rel (0) target = $region17
    $region16: #{tpu_custom_call.1} parent=1 // pred_region
      %205 = dma.done [#allocation6], 128
    $region17: #{tpu_custom_call.1} parent=1 // pred_fallthru
      _
    %206 = vsyncpa [#allocation5], 1
    %207 = vsyncpa [#allocation6], 1

</llo_original>
